<compile_context>
chip_gen: v5e
topology: v5e:2x2
jax: 0.10.0
libtpu: 0.0.40
codegen_flags: <defaults>
</compile_context>

<pallas_src>
import functools

import jax
import jax.numpy as jnp
from jax.experimental import pallas as pl
from jax.experimental.pallas import tpu as pltpu


IN_FEATURES = 20
HIDDEN = 40
OUT_FEATURES = 1


def _mlp_kernel(x_ref, w1_ref, b1_ref, w2_ref, b2_ref, o_ref):
    # x_ref : (TB, 20) f32   row-major batch tile (K=20 already on lanes)
    # w1_ref: (40, 20) f32   resident
    # b1_ref: (40, 1)  f32   resident (broadcasts along lanes)
    # w2_ref: (40, 1)  f32   resident (broadcasts along lanes)
    # b2_ref: (1, 1)   f32   resident
    # o_ref : (1, TB)  f32   lane-dense output tile
    x_bf = x_ref[...].astype(jnp.bfloat16)
    w1_bf = w1_ref[...].astype(jnp.bfloat16)

    # Layer 1 on the MXU: contract last dims of both operands (q.k^T pattern),
    # bf16 operands, f32 accumulation -> (40, TB) feature-major hidden.
    h = jax.lax.dot_general(
        w1_bf, x_bf,
        dimension_numbers=(((1,), (1,)), ((), ())),
        preferred_element_type=jnp.float32)

    # Bias + tanh in f32 (v5e-safe elementwise path).
    # TODO(synk): bf16 tanh on v6e/v7x would double EUP throughput if EUP binds.
    h = jnp.tanh(h + b1_ref[...])

    # Layer 2 off the MXU: weighted sublane reduction on VPU+XLU, output stays
    # lane-dense.
    out = jnp.sum(h * w2_ref[...], axis=0, keepdims=True) + b2_ref[...]
    o_ref[...] = out.astype(o_ref.dtype)


def _round_up(n, m):
    return ((n + m - 1) // m) * m


def _pick_tile(B, tile_b):
    """Pick a batch tile size: lane-aligned, balanced across tiles, and with
    >= 2 tiles for batches large enough that v7x megacore sharding matters."""
    min_tiles = 2 if B >= 2048 else 1
    n = max(min_tiles, -(-B // tile_b))
    tb = _round_up(-(-B // n), 128)
    if tb >= B:
        tb = B            # single full-extent block: always layout-legal
    n = -(-B // tb)
    return tb, n


@functools.partial(jax.jit, static_argnames=("tile_b",))
def feedforward_mlp(x, w1, b1, w2, b2, *, tile_b=16384):
    """Forward pass of the 20 -> 40 -> tanh -> 1 MLP.

    x : (B, 20) f32
    w1: (40, 20) f32  (PyTorch nn.Linear convention, out x in)
    b1: (40,)    f32
    w2: (1, 40)  f32
    b2: (1,)     f32
    returns (B, 1) f32
    """
    B, in_f = x.shape
    hid = w1.shape[0]

    tb, num_tiles = _pick_tile(B, tile_b)

    b1c = b1.reshape(hid, 1)
    w2c = w2.reshape(hid, 1)      # (1, 40) -> (40, 1): same element order
    b2c = b2.reshape(1, 1)

    flops = 2 * B * (in_f * hid + hid * OUT_FEATURES)
    bytes_accessed = 4 * (B * (in_f + OUT_FEATURES)
                          + w1.size + b1.size + w2.size + b2.size)

    # Explicit VMEM budget: the lane-padded (tb, 20) x tile dominates.
    vmem_est = (2 * tb * 128 * 4      # double-buffered x tile (lanes pad 20 -> 128)
                + tb * 128 * 2        # bf16 copy of the x tile
                + 3 * hid * tb * 4    # (40, tb) hidden + elementwise temps
                + 2 * 8 * tb * 4      # double-buffered (1, tb) output (sublane pad)
                + (1 << 20))          # weights / biases / misc
    vmem_limit = max(32 << 20, min(48 << 20, (vmem_est * 5) // 4))

    outT = pl.pallas_call(
        _mlp_kernel,
        out_shape=jax.ShapeDtypeStruct((1, B), jnp.float32),
        grid_spec=pltpu.PrefetchScalarGridSpec(
            num_scalar_prefetch=0,
            grid=(num_tiles,),
            in_specs=[
                pl.BlockSpec((tb, in_f), lambda i: (i, 0)),    # x: batch-tiled, row-major
                pl.BlockSpec((hid, in_f), lambda i: (0, 0)),   # w1: resident
                pl.BlockSpec((hid, 1), lambda i: (0, 0)),      # b1: resident
                pl.BlockSpec((hid, 1), lambda i: (0, 0)),      # w2 column: resident
                pl.BlockSpec((1, 1), lambda i: (0, 0)),        # b2: resident
            ],
            out_specs=pl.BlockSpec((1, tb), lambda i: (0, i)),
        ),
        compiler_params=pltpu.CompilerParams(
            dimension_semantics=("parallel",),
            vmem_limit_bytes=int(vmem_limit),
        ),
        cost_estimate=pl.CostEstimate(
            flops=flops,
            transcendentals=B * hid,
            bytes_accessed=bytes_accessed,
        ),
    )(x, w1, b1c, w2c, b2c)

    # (1, B) -> (B, 1): pure metadata reshape (no HBM pass).
    return outT.reshape(B, 1)


def init_params(key):
    """Deterministic init mirroring PyTorch nn.Linear defaults & shapes:
       a1: weight (40, 20), bias (40,);  a2: weight (1, 40), bias (1,)."""
    k1, k2, k3, k4 = jax.random.split(key, 4)
    lim1 = 1.0 / (IN_FEATURES ** 0.5)
    lim2 = 1.0 / (HIDDEN ** 0.5)
    w1 = jax.random.uniform(k1, (HIDDEN, IN_FEATURES), jnp.float32, -lim1, lim1)
    b1 = jax.random.uniform(k2, (HIDDEN,), jnp.float32, -lim1, lim1)
    w2 = jax.random.uniform(k3, (OUT_FEATURES, HIDDEN), jnp.float32, -lim2, lim2)
    b2 = jax.random.uniform(k4, (OUT_FEATURES,), jnp.float32, -lim2, lim2)
    return w1, b1, w2, b2


if __name__ == "__main__":
    key = jax.random.PRNGKey(0)
    kx1, kx2, kp = jax.random.split(key, 3)

    w1, b1, w2, b2 = init_params(kp)

    def reference(x):
        # PyTorch semantics: y = x @ W.T + b
        return jnp.tanh(x @ w1.T + b1) @ w2.T + b2

    # Small batch: single full-extent block.
    B1 = 8
    x1 = jax.random.normal(kx1, (B1, IN_FEATURES), jnp.float32)
    out1 = jax.block_until_ready(feedforward_mlp(x1, w1, b1, w2, b2))
    assert out1.shape == (B1, 1), out1.shape
    assert jnp.allclose(out1, reference(x1), atol=5e-2, rtol=5e-2)

    # Larger batch: multi-tile grid with a partial last tile (masked boundary).
    B2 = 2500
    x2 = jax.random.normal(kx2, (B2, IN_FEATURES), jnp.float32)
    out2 = jax.block_until_ready(feedforward_mlp(x2, w1, b1, w2, b2))
    assert out2.shape == (B2, 1), out2.shape
    assert jnp.allclose(out2, reference(x2), atol=5e-2, rtol=5e-2)

    print("KERNEL_OK")
</pallas_src>

<mosaic_0001>
module attributes {stable_mosaic.version = 11 : i64} {
  func.func @_mlp_kernel(%arg0: i32, %arg1: memref<8x20xf32, #tpu.memory_space<vmem>>, %arg2: memref<40x20xf32, #tpu.memory_space<vmem>>, %arg3: memref<40x1xf32, #tpu.memory_space<vmem>>, %arg4: memref<40x1xf32, #tpu.memory_space<vmem>>, %arg5: memref<1x1xf32, #tpu.memory_space<vmem>>, %arg6: memref<1x8xf32, #tpu.memory_space<vmem>>) attributes {dimension_semantics = [#tpu.dimension_semantics<parallel>], iteration_bounds = array<i64: 1>, scalar_prefetch = 0 : i64, scratch_operands = 0 : i64, tpu.core_type = #tpu.core_type<tc>, window_params = [{transform_indices = @transform_0, window_bounds = array<i64: 8, 20>}, {pipeline_mode = #tpu.pipeline_mode<synchronous>, transform_indices = @transform_1, window_bounds = array<i64: 40, 20>}, {pipeline_mode = #tpu.pipeline_mode<synchronous>, transform_indices = @transform_2, window_bounds = array<i64: 40, 1>}, {pipeline_mode = #tpu.pipeline_mode<synchronous>, transform_indices = @transform_3, window_bounds = array<i64: 40, 1>}, {pipeline_mode = #tpu.pipeline_mode<synchronous>, transform_indices = @transform_4, window_bounds = array<i64: 1, 1>}, {transform_indices = @transform_5, window_bounds = array<i64: 1, 8>}]} {
    %c0 = arith.constant 0 : index
    %c0_0 = arith.constant 0 : index
    %0 = vector.load %arg1[%c0, %c0_0] : memref<8x20xf32, #tpu.memory_space<vmem>>, vector<8x20xf32>
    %1 = arith.truncf %0 : vector<8x20xf32> to vector<8x20xbf16>
    %c0_1 = arith.constant 0 : index
    %c0_2 = arith.constant 0 : index
    %2 = vector.load %arg2[%c0_1, %c0_2] : memref<40x20xf32, #tpu.memory_space<vmem>>, vector<40x20xf32>
    %3 = arith.truncf %2 : vector<40x20xf32> to vector<40x20xbf16>
    %cst = arith.constant dense<0.000000e+00> : vector<40x8xf32>
    %4 = tpu.matmul %3, %1, %cst {dimension_numbers = #tpu.dot_dimension_numbers<[1], [1], [0], [0], [0, 0, 1, 0], [], []>} : vector<40x20xbf16>, vector<8x20xbf16>, vector<40x8xf32> -> vector<40x8xf32>
    %c0_3 = arith.constant 0 : index
    %c0_4 = arith.constant 0 : index
    %5 = vector.load %arg3[%c0_3, %c0_4] : memref<40x1xf32, #tpu.memory_space<vmem>>, vector<40x1xf32>
    %6 = vector.broadcast %5 : vector<40x1xf32> to vector<40x8xf32>
    %7 = arith.addf %4, %6 : vector<40x8xf32>
    %8 = math.tanh %7 : vector<40x8xf32>
    %c0_5 = arith.constant 0 : index
    %c0_6 = arith.constant 0 : index
    %9 = vector.load %arg4[%c0_5, %c0_6] : memref<40x1xf32, #tpu.memory_space<vmem>>, vector<40x1xf32>
    %10 = vector.broadcast %9 : vector<40x1xf32> to vector<40x8xf32>
    %11 = arith.mulf %8, %10 : vector<40x8xf32>
    %cst_7 = arith.constant dense<0.000000e+00> : vector<8xf32>
    %12 = vector.multi_reduction <add>, %11, %cst_7 [0] : vector<40x8xf32> to vector<8xf32>
    %13 = vector.shape_cast %12 : vector<8xf32> to vector<1x8xf32>
    %c0_8 = arith.constant 0 : index
    %c0_9 = arith.constant 0 : index
    %14 = vector.load %arg5[%c0_8, %c0_9] : memref<1x1xf32, #tpu.memory_space<vmem>>, vector<1x1xf32>
    %15 = vector.broadcast %14 : vector<1x1xf32> to vector<1x8xf32>
    %16 = arith.addf %13, %15 : vector<1x8xf32>
    %c0_10 = arith.constant 0 : index
    %c0_11 = arith.constant 0 : index
    %17 = vector.load %arg6[%c0_10, %c0_11] : memref<1x8xf32, #tpu.memory_space<vmem>>, vector<1x8xf32>
    tpu.vector_store %arg6[%c0_10, %c0_11], %16 {strides = array<i32>} : memref<1x8xf32, #tpu.memory_space<vmem>>, vector<1x8xf32>,
    return
  }
  func.func @transform_0(%arg0: i32) -> (i32, i32) {
    %c0_i32 = arith.constant 0 : i32
    %c0_i32_0 = arith.constant 0 : i32
    return %arg0, %c0_i32 : i32, i32
  }
  func.func @transform_1(%arg0: i32) -> (i32, i32) {
    %c0_i32 = arith.constant 0 : i32
    %c0_i32_0 = arith.constant 0 : i32
    %c0_i32_1 = arith.constant 0 : i32
    return %c0_i32, %c0_i32_0 : i32, i32
  }
  func.func @transform_2(%arg0: i32) -> (i32, i32) {
    %c0_i32 = arith.constant 0 : i32
    %c0_i32_0 = arith.constant 0 : i32
    %c0_i32_1 = arith.constant 0 : i32
    return %c0_i32, %c0_i32_0 : i32, i32
  }
  func.func @transform_3(%arg0: i32) -> (i32, i32) {
    %c0_i32 = arith.constant 0 : i32
    %c0_i32_0 = arith.constant 0 : i32
    %c0_i32_1 = arith.constant 0 : i32
    return %c0_i32, %c0_i32_0 : i32, i32
  }
  func.func @transform_4(%arg0: i32) -> (i32, i32) {
    %c0_i32 = arith.constant 0 : i32
    %c0_i32_0 = arith.constant 0 : i32
    %c0_i32_1 = arith.constant 0 : i32
    return %c0_i32, %c0_i32_0 : i32, i32
  }
  func.func @transform_5(%arg0: i32) -> (i32, i32) {
    %c0_i32 = arith.constant 0 : i32
    %c0_i32_0 = arith.constant 0 : i32
    return %c0_i32, %arg0 : i32, i32
  }
}

</mosaic_0001>

<llo_original>
// kernel: feedforward_mlp.1
$region0: #{feedforward_mlp.1}
  #allocation0 [shape = 'u32[]', space=smem, size = 0x4, offset = 0x4, fixed_abs, tag = 'smem constant byte address 0x4 - core index']
  #allocation1 [shape = 'u32[72,128]{1,0:T(1,128)}', space=vmem, size = 0x9000, scoped, tag = 'internal scratch']
  #allocation2 [shape = 'f32[1,1]{1,0:T(1,128)S(1)}', space=vmem, size = 0x200, scoped, tag = 'scoped memory for feedforward_mlp.1']
  %s0 = inlined_call_operand.vmem [shape: f32[8,20], index: 0, kind: input, shape index: {}]
  %s1 = inlined_call_operand.vmem [shape: f32[40,20], index: 1, kind: input, shape index: {}]
  %s2 = inlined_call_operand.vmem [shape: f32[40,1], index: 2, kind: input, shape index: {}]
  %s3 = inlined_call_operand.vmem [shape: f32[40,1], index: 3, kind: input, shape index: {}]
  %s4 = inlined_call_operand.<no memory space> [shape: f32[1,1], index: 4, kind: input, shape index: {}]
  %s5 = inlined_call_operand.hbm [shape: f32[1,8], index: 5, kind: output, shape index: {}]
  %s6 = sld [smem:[#allocation0]]
  $region30: #{feedforward_mlp.1} parent=0
    _
  %s8 = ssub.s32 1, %s6
  %s9 = scalar_select 0, %s8, %s6
  %v10 = vstv %s4
  %11 = vst [vmem:[#allocation2] sm:$0x1] %v10
  $region1: #{feedforward_mlp.1} parent=0
    #allocation3 [shape = 'u8[512]{0}', space=vmem, size = 0x400, scoped, tag = 'output window, operand 0, single buffered']
    #allocation4 [shape = 's32[1]{0}', space=sflag, size = 0x4, scoped, tag = 'scoped memory for feedforward_mlp.1']
    %12 = vsyncpa [#allocation4], 0
    // Predicated region
    $region2: #{feedforward_mlp.1} parent=1 // pred_check
      _
    $region3: #{feedforward_mlp.1} parent=1 // pred_check_branch
      %14 = sbr.rel (0) target = $region5
    $region4: #{feedforward_mlp.1} parent=1 // pred_region
      _
    $region5: #{feedforward_mlp.1} parent=1 // pred_fallthru
      _
    // Predicated region
    $region6: #{feedforward_mlp.1} parent=1 // pred_check
      _
    $region7: #{feedforward_mlp.1} parent=1 // pred_check_branch
      %16 = sbr.rel (0) target = $region9
    $region8: #{feedforward_mlp.1} parent=1 // pred_region
      _
    $region9: #{feedforward_mlp.1} parent=1 // pred_fallthru
      _
    // Predicated region
    $region10: #{feedforward_mlp.1} parent=1 // pred_check
      _
    $region11: #{feedforward_mlp.1} parent=1 // pred_check_branch
      %18 = sbr.rel (0) target = $region13
    $region12: #{feedforward_mlp.1} parent=1 // pred_region
      _
    $region13: #{feedforward_mlp.1} parent=1 // pred_fallthru
      _
    // Predicated region
    $region14: #{feedforward_mlp.1} parent=1 // pred_check
      _
    $region15: #{feedforward_mlp.1} parent=1 // pred_check_branch
      %20 = sbr.rel (0) target = $region17
    $region16: #{feedforward_mlp.1} parent=1 // pred_region
      _
    $region17: #{feedforward_mlp.1} parent=1 // pred_fallthru
      _
    // Predicated region
    $region18: #{feedforward_mlp.1} parent=1 // pred_check
      _
    $region19: #{feedforward_mlp.1} parent=1 // pred_check_branch
      %22 = sbr.rel (0) target = $region21
    $region20: #{feedforward_mlp.1} parent=1 // pred_region
      _
    $region21: #{feedforward_mlp.1} parent=1 // pred_fallthru
      _
    %v24 = vld [vmem:[%s0] sm:$0xff]
    %v25 = vpack.c.bf16 %v24, %v24
    %v26 = vld [vmem:[%s1] sm:$0xff]
    %v27 = vld [vmem:[%s1 + $0x8] sm:$0xff]
    %v28 = vld [vmem:[%s1 + $0x10] sm:$0xff]
    %v29 = vld [vmem:[%s1 + $0x18] sm:$0xff]
    %v30 = vld [vmem:[%s1 + $0x20] sm:$0xff]
    %v31 = vpack.c.bf16 %v27, %v26
    %v32 = vpack.c.bf16 %v29, %v28
    %v33 = vpack.c.bf16 %v30, %v30
    %v34 = vld [vmem:[%s2] sm:$0xff]
    %v35 = vld [vmem:[%s2 + $0x8] sm:$0xff]
    %v36 = vld [vmem:[%s2 + $0x10] sm:$0xff]
    %v37 = vld [vmem:[%s2 + $0x18] sm:$0xff]
    %v38 = vld [vmem:[%s2 + $0x20] sm:$0xff]
    %40 = vset.pattern.permute.xlu0 0
    %41 = vperm.xlu0 %40, %v34
    %v42 = vpop.permute.xlu0 %41
    %45 = vset.pattern.permute.xlu0 0
    %46 = vperm.xlu0 %45, %v35
    %v47 = vpop.permute.xlu0 %46
    %50 = vset.pattern.permute.xlu0 0
    %51 = vperm.xlu0 %50, %v36
    %v52 = vpop.permute.xlu0 %51
    %55 = vset.pattern.permute.xlu0 0
    %56 = vperm.xlu0 %55, %v37
    %v57 = vpop.permute.xlu0 %56
    %60 = vset.pattern.permute.xlu0 0
    %61 = vperm.xlu0 %60, %v38
    %v62 = vpop.permute.xlu0 %61
    %vm64 = vcmask 162816
    %v66 = vsel %vm64, %v31, 0
    %v69 = vsel %vm64, %v32, 0
    %v72 = vsel %vm64, %v33, 0
    %v75 = vsel %vm64, %v25, 0
    %77 = vmatpush.bf16.xpose.msra.mxu0 0
    %78 = vmatpush.bf16.xpose.msra.mxu0 0
    %79 = vmatpush.bf16.xpose.msra.mxu0 0
    %80 = vmatpush.bf16.xpose.msra.mxu0 0
    %81 = vmatpush.bf16.xpose.msra.mxu0 0
    %82 = vmatpush.bf16.xpose.msra.mxu0 0
    %83 = vmatpush.bf16.xpose.msra.mxu0 0
    %84 = vmatpush.bf16.xpose.msra.mxu0 %v75
    %85 = vmatmul.bf16.gmra.mxu0 %v66
    %v86 = vpop.f32.mrf.mxu0
    %v87 = vadd.f32 %v42, %v86
    %v88 = vpop.f32.mrf.mxu0
    %v89 = vadd.f32 %v47, %v88
    %90 = vmatmul.bf16.gmra.mxu0 %v69
    %v91 = vpop.f32.mrf.mxu0
    %v92 = vadd.f32 %v52, %v91
    %v93 = vpop.f32.mrf.mxu0
    %v94 = vadd.f32 %v57, %v93
    %95 = vmatmul.bf16.gmra.mxu0 %v72
    %v96 = vpop.f32.mrf.mxu0
    %v97 = vadd.f32 %v62, %v96
    %v98 = vpop.f32.mrf.mxu0
    %99 = vdwg.mxu0
    %v100 = vtanh.pop %v87
    %v101 = vtanh.pop %v89
    %v102 = vtanh.pop %v92
    %v103 = vtanh.pop %v94
    %v104 = vtanh.pop %v97
    %v105 = vld [vmem:[%s3] sm:$0xff]
    %v106 = vld [vmem:[%s3 + $0x8] sm:$0xff]
    %v107 = vld [vmem:[%s3 + $0x10] sm:$0xff]
    %v108 = vld [vmem:[%s3 + $0x18] sm:$0xff]
    %v109 = vld [vmem:[%s3 + $0x20] sm:$0xff]
    %111 = vset.pattern.permute.xlu0 0
    %112 = vperm.xlu0 %111, %v105
    %v113 = vpop.permute.xlu0 %112
    %116 = vset.pattern.permute.xlu0 0
    %117 = vperm.xlu0 %116, %v106
    %v118 = vpop.permute.xlu0 %117
    %121 = vset.pattern.permute.xlu0 0
    %122 = vperm.xlu0 %121, %v107
    %v123 = vpop.permute.xlu0 %122
    %126 = vset.pattern.permute.xlu0 0
    %127 = vperm.xlu0 %126, %v108
    %v128 = vpop.permute.xlu0 %127
    %131 = vset.pattern.permute.xlu0 0
    %132 = vperm.xlu0 %131, %v109
    %v133 = vpop.permute.xlu0 %132
    %v135 = vmul.f32 %v100, %v113
    %v136 = vmul.f32 %v101, %v118
    %v137 = vmul.f32 %v102, %v123
    %v138 = vmul.f32 %v103, %v128
    %v139 = vmul.f32 %v104, %v133
    %vm140 = vcmask 64512
    %v141 = vsel %vm140, %v135, 0.0
    %v142 = vsel %vm140, %v136, 0.0
    %v143 = vadd.f32 %v141, %v142
    %v144 = vsel %vm140, %v137, 0.0
    %v145 = vadd.f32 %v143, %v144
    %v146 = vsel %vm140, %v138, 0.0
    %v147 = vadd.f32 %v145, %v146
    %v148 = vsel %vm140, %v139, 0.0
    %v149 = vadd.f32 %v147, %v148
    %v150 = vrot.slane %v149, 4
    %v151 = vadd.f32 %v149, %v150
    %v152 = vrot.slane %v151, 2
    %v153 = vadd.f32 %v151, %v152
    %v154 = vrot.slane %v153, 1
    %v155 = vadd.f32 %v153, %v154
    %v156 = vld [vmem:[#allocation2] sm:$0x1]
    %158 = vset.pattern.permute.xlu0 0
    %159 = vperm.xlu0 %158, %v156
    %v160 = vpop.permute.xlu0 %159
    %v162 = vperm.slane %v160, 0
    %v163 = vadd.f32 %v155, %v162
    %vm164 = vcmask 57344
    %165 = vst.msk [vmem:[#allocation3] sm:$0x1] %vm164, %v163
    // Predicated region
    $region22: #{feedforward_mlp.1} parent=1 // pred_check
      _
    $region23: #{feedforward_mlp.1} parent=1 // pred_check_branch
      %167 = sbr.rel (0) target = $region25
    $region24: #{feedforward_mlp.1} parent=1 // pred_region
      %169 = vsyncadd [#allocation4], 0
      %s171 = sshll.u32 [#allocation3], 4
      %s172 = int_to_ptr.vmem [resolvable:$true] %s171
      %s173 = sshll.u32 %s5, 4
      %s174 = int_to_ptr.hbm [resolvable:$true] %s173
      %176 = dma.vmem_to_hbm [thread:$0]  %s172, 16, %s174, [#allocation4]
    $region25: #{feedforward_mlp.1} parent=1 // pred_fallthru
      _
    // Predicated region
    $region26: #{feedforward_mlp.1} parent=1 // pred_check
      _
    $region27: #{feedforward_mlp.1} parent=1 // pred_check_branch
      %178 = sbr.rel (0) target = $region29
    $region28: #{feedforward_mlp.1} parent=1 // pred_region
      %180 = dma.done [#allocation4], 16
    $region29: #{feedforward_mlp.1} parent=1 // pred_fallthru
      _
    %181 = vsyncpa [#allocation4], 1

</llo_original>
